<compile_context>
chip_gen: v7x
topology: tpu7x:2x2x1
jax: 0.10.0
libtpu: 0.0.40
codegen_flags: <defaults>
</compile_context>

<pallas_src>
import jax
import jax.numpy as jnp
from jax.experimental import pallas as pl
from jax.experimental.pallas import tpu as pltpu

_VMEM_BLOCK_BUDGET = 24 << 20   # double-buffered block bytes per pallas_call
_VMEM_LIMIT_BYTES = 32 << 20    # safe on v5e/v6e (128 MiB) and v7x (64 MiB)


def _make_conv_stats_kernel(num_inputs, hw, tile_hw, compute_dtype):
    """1x1 conv over one (n, spatial-tile) block + per-tile channel sum/sumsq."""
    needs_mask = (hw % tile_hw) != 0

    def kernel(*refs):
        xs = refs[:num_inputs]                # each (1, C_i, tile_hw), f32 HBM
        ws = refs[num_inputs:2 * num_inputs]  # each (C_out, C_i), resident
        y_ref = refs[2 * num_inputs]          # (1, C_out, tile_hw)
        ssum_ref = refs[2 * num_inputs + 1]   # (1, 1, C_out, 1)
        ssq_ref = refs[2 * num_inputs + 2]    # (1, 1, C_out, 1)

        # Cast activations in-register (VPU) right before the MXU dot so HBM
        # keeps the original f32 tensors (no wrapper-side astype pass).
        acc = jnp.dot(ws[0][...], xs[0][0].astype(compute_dtype),
                      preferred_element_type=jnp.float32)
        for i in range(1, num_inputs):
            acc = acc + jnp.dot(ws[i][...], xs[i][0].astype(compute_dtype),
                                preferred_element_type=jnp.float32)

        y_ref[0] = acc.astype(y_ref.dtype)    # OOB tail columns clipped on store

        if needs_mask:
            s = pl.program_id(1)
            valid = jnp.minimum(tile_hw, hw - s * tile_hw)
            col = jax.lax.broadcasted_iota(jnp.int32, acc.shape, 1)
            acc = jnp.where(col < valid, acc, 0.0)

        ssum_ref[0, 0] = jnp.sum(acc, axis=-1, keepdims=True)
        ssq_ref[0, 0] = jnp.sum(acc * acc, axis=-1, keepdims=True)

    return kernel


def _bn_relu_apply_kernel(y_ref, scale_ref, bias_ref, o_ref):
    # y_ref: (1, C_out, tile_hw); scale/bias: (C_out, 1) broadcast over lanes.
    y = y_ref[0].astype(jnp.float32)
    out = y * scale_ref[...] + bias_ref[...]
    o_ref[0] = jnp.maximum(out, 0.0).astype(o_ref.dtype)


def _pick_tile_hw(hw, bytes_per_lane, max_tile_hw):
    """Multiple-of-128 spatial tile, bounded by VMEM budget and padded HW."""
    cap = max(128, (_VMEM_BLOCK_BUDGET // (2 * bytes_per_lane)) // 128 * 128)
    hw_pad = -(-hw // 128) * 128
    return min(max(128, (max_tile_hw // 128) * 128), cap, hw_pad)


def root_forward(xs_nchw, weight, gamma, beta, eps=1e-5,
                 conv_io_dtype=jnp.float32, out_dtype=None, max_tile_hw=16384):
    """xs_nchw: list of (N, C_i, H, W). weight: (C_out, C_in, 1, 1)."""
    if out_dtype is None:
        out_dtype = conv_io_dtype
    N, _, H, W = xs_nchw[0].shape
    HW = H * W
    cs = [int(x.shape[1]) for x in xs_nchw]
    C_in = sum(cs)
    C_out = int(weight.shape[0])
    assert weight.shape == (C_out, C_in, 1, 1), "only kernel_size=1 supported"

    io_bytes = jnp.dtype(conv_io_dtype).itemsize
    x_bytes = sum(int(jnp.dtype(x.dtype).itemsize) * c
                  for x, c in zip(xs_nchw, cs))
    bytes_per_lane = x_bytes + C_out * io_bytes
    tile_hw = _pick_tile_hw(HW, bytes_per_lane, max_tile_hw)
    num_s = pl.cdiv(HW, tile_hw)

    # Pure views: no concat, no layout transpose, no wrapper-side dtype cast.
    xs_flat = [x.reshape(N, c, HW) for x, c in zip(xs_nchw, cs)]
    w2 = weight.reshape(C_out, C_in)
    w_parts, off = [], 0
    for c in cs:
        w_parts.append(w2[:, off:off + c].astype(conv_io_dtype))
        off += c

    x_specs = [pl.BlockSpec((1, c, tile_hw), lambda n, s: (n, 0, s)) for c in cs]
    w_specs = [pl.BlockSpec((C_out, c), lambda n, s: (0, 0)) for c in cs]

    cparams = pltpu.CompilerParams(
        dimension_semantics=("parallel", "parallel"),
        vmem_limit_bytes=_VMEM_LIMIT_BYTES)

    # --- pass 1: 1x1 conv (MXU) + per-tile per-channel sum / sumsq ---
    y, ssum, ssq = pl.pallas_call(
        _make_conv_stats_kernel(len(cs), HW, tile_hw, conv_io_dtype),
        grid=(N, num_s),
        in_specs=x_specs + w_specs,
        out_specs=(
            pl.BlockSpec((1, C_out, tile_hw), lambda n, s: (n, 0, s)),
            pl.BlockSpec((1, 1, C_out, 1), lambda n, s: (n, s, 0, 0)),
            pl.BlockSpec((1, 1, C_out, 1), lambda n, s: (n, s, 0, 0)),
        ),
        out_shape=(
            jax.ShapeDtypeStruct((N, C_out, HW), conv_io_dtype),
            jax.ShapeDtypeStruct((N, num_s, C_out, 1), jnp.float32),
            jax.ShapeDtypeStruct((N, num_s, C_out, 1), jnp.float32),
        ),
        compiler_params=cparams,
    )(*xs_flat, *w_parts)

    # Tiny O(N*num_s*C_out) reduction / BN affine fold in plain JAX.
    m = jnp.float32(N * HW)
    mean = jnp.sum(ssum, axis=(0, 1, 3)) / m
    var = jnp.maximum(jnp.sum(ssq, axis=(0, 1, 3)) / m - mean * mean, 0.0)
    inv = jax.lax.rsqrt(var + jnp.float32(eps))
    g = gamma.astype(jnp.float32)
    scale = (g * inv).reshape(C_out, 1)
    bias = (beta.astype(jnp.float32) - mean * g * inv).reshape(C_out, 1)

    # --- pass 2: tiled BN apply + ReLU; output overwrites y's HBM buffer ---
    alias = {0: 0} if jnp.dtype(out_dtype) == jnp.dtype(conv_io_dtype) else {}
    out = pl.pallas_call(
        _bn_relu_apply_kernel,
        grid=(N, num_s),
        in_specs=[
            pl.BlockSpec((1, C_out, tile_hw), lambda n, s: (n, 0, s)),
            pl.BlockSpec((C_out, 1), lambda n, s: (0, 0)),
            pl.BlockSpec((C_out, 1), lambda n, s: (0, 0)),
        ],
        out_specs=pl.BlockSpec((1, C_out, tile_hw), lambda n, s: (n, 0, s)),
        out_shape=jax.ShapeDtypeStruct((N, C_out, HW), out_dtype),
        input_output_aliases=alias,
        compiler_params=cparams,
    )(y, scale, bias)

    return out.reshape(N, C_out, H, W)


def root_reference(xs_nchw, weight, gamma, beta, eps=1e-5):
    x = jnp.concatenate(xs_nchw, axis=1).astype(jnp.float32)
    C_out = weight.shape[0]
    w2 = weight.reshape(C_out, -1).astype(jnp.float32)
    y = jnp.einsum("nchw,oc->nohw", x, w2)
    mean = jnp.mean(y, axis=(0, 2, 3), keepdims=True)
    var = jnp.mean((y - mean) ** 2, axis=(0, 2, 3), keepdims=True)
    yhat = (y - mean) * jax.lax.rsqrt(var + eps)
    out = yhat * gamma.reshape(1, C_out, 1, 1) + beta.reshape(1, C_out, 1, 1)
    return jnp.maximum(out, 0.0)


if __name__ == "__main__":
    key = jax.random.PRNGKey(0)
    k1, k2, k3, k4, k5, k6, k7 = jax.random.split(key, 7)

    # Two feature maps of (N=2, C=16, H=16, W=16) -> C_in = 32, C_out = 16
    N, H, W = 2, 16, 16
    c1, c2 = 16, 16
    in_channels = c1 + c2
    out_channels = 16

    xs = [
        jax.random.normal(k1, (N, c1, H, W), dtype=jnp.float32),
        jax.random.normal(k2, (N, c2, H, W), dtype=jnp.float32),
    ]
    # Conv2d(in_channels, out_channels, 1, bias=False): (C_out, C_in, 1, 1)
    weight = jax.random.normal(
        k3, (out_channels, in_channels, 1, 1), dtype=jnp.float32) * 0.1
    gamma = 1.0 + 0.1 * jax.random.normal(k4, (out_channels,), dtype=jnp.float32)
    beta = 0.1 * jax.random.normal(k5, (out_channels,), dtype=jnp.float32)

    run_f32 = jax.jit(lambda xs_, w_, g_, b_: root_forward(xs_, w_, g_, b_))
    out = jax.block_until_ready(run_f32(xs, weight, gamma, beta))
    ref = root_reference(xs, weight, gamma, beta)
    assert out.shape == (N, out_channels, H, W)
    assert out.dtype == jnp.float32
    err = float(jnp.max(jnp.abs(out - ref)))
    assert err < 2e-3, err

    # bf16 I/O path: y + final output bf16 (halves their HBM streams); x stays
    # f32 in HBM and is cast in-register; BN stats / apply math stay f32.
    run_bf16 = jax.jit(lambda xs_, w_, g_, b_: root_forward(
        xs_, w_, g_, b_, conv_io_dtype=jnp.bfloat16))
    out_bf16 = jax.block_until_ready(run_bf16(xs, weight, gamma, beta))
    assert out_bf16.dtype == jnp.bfloat16
    out_bf16_f32 = out_bf16.astype(jnp.float32)
    assert bool(jnp.all(jnp.isfinite(out_bf16_f32)))
    assert float(jnp.mean(jnp.abs(out_bf16_f32 - ref))) < 5e-2

    # DLA-style non-128-multiple spatial size (7x7) exercises the cdiv grid
    # and the masked-tail-lane statistics path.
    H2 = W2 = 7
    xs_small = [
        jax.random.normal(k6, (N, c1, H2, W2), dtype=jnp.float32),
        jax.random.normal(k7, (N, c2, H2, W2), dtype=jnp.float32),
    ]
    out2 = jax.block_until_ready(run_f32(xs_small, weight, gamma, beta))
    ref2 = root_reference(xs_small, weight, gamma, beta)
    err2 = float(jnp.max(jnp.abs(out2 - ref2)))
    assert out2.shape == (N, out_channels, H2, W2)
    assert err2 < 2e-3, err2

    print("KERNEL_OK")
</pallas_src>

<mosaic_0001>
module attributes {stable_mosaic.version = 11 : i64} {
  func.func @kernel(%arg0: i32, %arg1: i32, %arg2: memref<1x16x256xf32, #tpu.memory_space<vmem>>, %arg3: memref<1x16x256xf32, #tpu.memory_space<vmem>>, %arg4: memref<16x16xf32, #tpu.memory_space<vmem>>, %arg5: memref<16x16xf32, #tpu.memory_space<vmem>>, %arg6: memref<1x16x256xf32, #tpu.memory_space<vmem>>, %arg7: memref<1x1x16x1xf32, #tpu.memory_space<vmem>>, %arg8: memref<1x1x16x1xf32, #tpu.memory_space<vmem>>) attributes {dimension_semantics = [#tpu.dimension_semantics<parallel>, #tpu.dimension_semantics<parallel>], iteration_bounds = array<i64: 2, 1>, scalar_prefetch = 0 : i64, scratch_operands = 0 : i64, tpu.core_type = #tpu.core_type<tc>, window_params = [{transform_indices = @transform_0, window_bounds = array<i64: 1, 16, 256>}, {transform_indices = @transform_1, window_bounds = array<i64: 1, 16, 256>}, {pipeline_mode = #tpu.pipeline_mode<synchronous>, transform_indices = @transform_2, window_bounds = array<i64: 16, 16>}, {pipeline_mode = #tpu.pipeline_mode<synchronous>, transform_indices = @transform_3, window_bounds = array<i64: 16, 16>}, {transform_indices = @transform_4, window_bounds = array<i64: 1, 16, 256>}, {transform_indices = @transform_5, window_bounds = array<i64: 1, 1, 16, 1>}, {transform_indices = @transform_6, window_bounds = array<i64: 1, 1, 16, 1>}]} {
    %c0 = arith.constant 0 : index
    %c0_0 = arith.constant 0 : index
    %0 = vector.load %arg4[%c0, %c0_0] : memref<16x16xf32, #tpu.memory_space<vmem>>, vector<16x16xf32>
    %c0_1 = arith.constant 0 : index
    %c0_2 = arith.constant 0 : index
    %c0_3 = arith.constant 0 : index
    %1 = vector.load %arg2[%c0_1, %c0_2, %c0_3] : memref<1x16x256xf32, #tpu.memory_space<vmem>>, vector<1x16x256xf32>
    %2 = vector.shape_cast %1 : vector<1x16x256xf32> to vector<16x256xf32>
    %cst = arith.constant dense<0.000000e+00> : vector<16x256xf32>
    %3 = tpu.matmul %0, %2, %cst {dimension_numbers = #tpu.dot_dimension_numbers<[1], [0], [0], [1], [0, 0, 1, 1], [], []>} : vector<16x16xf32>, vector<16x256xf32>, vector<16x256xf32> -> vector<16x256xf32>
    %c0_4 = arith.constant 0 : index
    %c0_5 = arith.constant 0 : index
    %4 = vector.load %arg5[%c0_4, %c0_5] : memref<16x16xf32, #tpu.memory_space<vmem>>, vector<16x16xf32>
    %c0_6 = arith.constant 0 : index
    %c0_7 = arith.constant 0 : index
    %c0_8 = arith.constant 0 : index
    %5 = vector.load %arg3[%c0_6, %c0_7, %c0_8] : memref<1x16x256xf32, #tpu.memory_space<vmem>>, vector<1x16x256xf32>
    %6 = vector.shape_cast %5 : vector<1x16x256xf32> to vector<16x256xf32>
    %cst_9 = arith.constant dense<0.000000e+00> : vector<16x256xf32>
    %7 = tpu.matmul %4, %6, %cst_9 {dimension_numbers = #tpu.dot_dimension_numbers<[1], [0], [0], [1], [0, 0, 1, 1], [], []>} : vector<16x16xf32>, vector<16x256xf32>, vector<16x256xf32> -> vector<16x256xf32>
    %8 = arith.addf %3, %7 : vector<16x256xf32>
    %c0_10 = arith.constant 0 : index
    %c0_11 = arith.constant 0 : index
    %c0_12 = arith.constant 0 : index
    %9 = vector.load %arg6[%c0_10, %c0_11, %c0_12] : memref<1x16x256xf32, #tpu.memory_space<vmem>>, vector<1x16x256xf32>
    %10 = vector.shape_cast %9 : vector<1x16x256xf32> to vector<16x256xf32>
    %11 = vector.shape_cast %8 : vector<16x256xf32> to vector<1x16x256xf32>
    tpu.vector_store %arg6[%c0_10, %c0_11, %c0_12], %11 {strides = array<i32>} : memref<1x16x256xf32, #tpu.memory_space<vmem>>, vector<1x16x256xf32>,
    %cst_13 = arith.constant dense<0.000000e+00> : vector<16xf32>
    %12 = vector.multi_reduction <add>, %8, %cst_13 [1] : vector<16x256xf32> to vector<16xf32>
    %13 = vector.shape_cast %12 : vector<16xf32> to vector<16x1xf32>
    %c0_14 = arith.constant 0 : index
    %c0_15 = arith.constant 0 : index
    %c0_16 = arith.constant 0 : index
    %c0_17 = arith.constant 0 : index
    %14 = vector.load %arg7[%c0_14, %c0_15, %c0_16, %c0_17] : memref<1x1x16x1xf32, #tpu.memory_space<vmem>>, vector<1x1x16x1xf32>
    %15 = vector.shape_cast %14 : vector<1x1x16x1xf32> to vector<16x1xf32>
    %16 = vector.shape_cast %13 : vector<16x1xf32> to vector<1x1x16x1xf32>
    tpu.vector_store %arg7[%c0_14, %c0_15, %c0_16, %c0_17], %16 {strides = array<i32>} : memref<1x1x16x1xf32, #tpu.memory_space<vmem>>, vector<1x1x16x1xf32>,
    %17 = arith.mulf %8, %8 : vector<16x256xf32>
    %cst_18 = arith.constant dense<0.000000e+00> : vector<16xf32>
    %18 = vector.multi_reduction <add>, %17, %cst_18 [1] : vector<16x256xf32> to vector<16xf32>
    %19 = vector.shape_cast %18 : vector<16xf32> to vector<16x1xf32>
    %c0_19 = arith.constant 0 : index
    %c0_20 = arith.constant 0 : index
    %c0_21 = arith.constant 0 : index
    %c0_22 = arith.constant 0 : index
    %20 = vector.load %arg8[%c0_19, %c0_20, %c0_21, %c0_22] : memref<1x1x16x1xf32, #tpu.memory_space<vmem>>, vector<1x1x16x1xf32>
    %21 = vector.shape_cast %20 : vector<1x1x16x1xf32> to vector<16x1xf32>
    %22 = vector.shape_cast %19 : vector<16x1xf32> to vector<1x1x16x1xf32>
    tpu.vector_store %arg8[%c0_19, %c0_20, %c0_21, %c0_22], %22 {strides = array<i32>} : memref<1x1x16x1xf32, #tpu.memory_space<vmem>>, vector<1x1x16x1xf32>,
    return
  }
  func.func @transform_0(%arg0: i32, %arg1: i32) -> (i32, i32, i32) {
    %c0_i32 = arith.constant 0 : i32
    %c0_i32_0 = arith.constant 0 : i32
    return %arg0, %c0_i32, %arg1 : i32, i32, i32
  }
  func.func @transform_1(%arg0: i32, %arg1: i32) -> (i32, i32, i32) {
    %c0_i32 = arith.constant 0 : i32
    %c0_i32_0 = arith.constant 0 : i32
    return %arg0, %c0_i32, %arg1 : i32, i32, i32
  }
  func.func @transform_2(%arg0: i32, %arg1: i32) -> (i32, i32) {
    %c0_i32 = arith.constant 0 : i32
    %c0_i32_0 = arith.constant 0 : i32
    %c0_i32_1 = arith.constant 0 : i32
    return %c0_i32, %c0_i32_0 : i32, i32
  }
  func.func @transform_3(%arg0: i32, %arg1: i32) -> (i32, i32) {
    %c0_i32 = arith.constant 0 : i32
    %c0_i32_0 = arith.constant 0 : i32
    %c0_i32_1 = arith.constant 0 : i32
    return %c0_i32, %c0_i32_0 : i32, i32
  }
  func.func @transform_4(%arg0: i32, %arg1: i32) -> (i32, i32, i32) {
    %c0_i32 = arith.constant 0 : i32
    %c0_i32_0 = arith.constant 0 : i32
    return %arg0, %c0_i32, %arg1 : i32, i32, i32
  }
  func.func @transform_5(%arg0: i32, %arg1: i32) -> (i32, i32, i32, i32) {
    %c0_i32 = arith.constant 0 : i32
    %c0_i32_0 = arith.constant 0 : i32
    %c0_i32_1 = arith.constant 0 : i32
    return %arg0, %arg1, %c0_i32, %c0_i32_0 : i32, i32, i32, i32
  }
  func.func @transform_6(%arg0: i32, %arg1: i32) -> (i32, i32, i32, i32) {
    %c0_i32 = arith.constant 0 : i32
    %c0_i32_0 = arith.constant 0 : i32
    %c0_i32_1 = arith.constant 0 : i32
    return %arg0, %arg1, %c0_i32, %c0_i32_0 : i32, i32, i32, i32
  }
}

module attributes {stable_mosaic.version = 11 : i64} {
  func.func @_bn_relu_apply_kernel(%arg0: i32, %arg1: i32, %arg2: memref<1x16x256xf32, #tpu.memory_space<vmem>>, %arg3: memref<16x1xf32, #tpu.memory_space<vmem>>, %arg4: memref<16x1xf32, #tpu.memory_space<vmem>>, %arg5: memref<1x16x256xf32, #tpu.memory_space<vmem>>) attributes {dimension_semantics = [#tpu.dimension_semantics<parallel>, #tpu.dimension_semantics<parallel>], iteration_bounds = array<i64: 2, 1>, scalar_prefetch = 0 : i64, scratch_operands = 0 : i64, tpu.core_type = #tpu.core_type<tc>, window_params = [{transform_indices = @transform_0, window_bounds = array<i64: 1, 16, 256>}, {pipeline_mode = #tpu.pipeline_mode<synchronous>, transform_indices = @transform_1, window_bounds = array<i64: 16, 1>}, {pipeline_mode = #tpu.pipeline_mode<synchronous>, transform_indices = @transform_2, window_bounds = array<i64: 16, 1>}, {transform_indices = @transform_3, window_bounds = array<i64: 1, 16, 256>}]} {
    %c0 = arith.constant 0 : index
    %c0_0 = arith.constant 0 : index
    %c0_1 = arith.constant 0 : index
    %0 = vector.load %arg2[%c0, %c0_0, %c0_1] : memref<1x16x256xf32, #tpu.memory_space<vmem>>, vector<1x16x256xf32>
    %1 = vector.shape_cast %0 : vector<1x16x256xf32> to vector<16x256xf32>
    %c0_2 = arith.constant 0 : index
    %c0_3 = arith.constant 0 : index
    %2 = vector.load %arg3[%c0_2, %c0_3] : memref<16x1xf32, #tpu.memory_space<vmem>>, vector<16x1xf32>
    %3 = vector.broadcast %2 : vector<16x1xf32> to vector<16x256xf32>
    %4 = arith.mulf %1, %3 : vector<16x256xf32>
    %c0_4 = arith.constant 0 : index
    %c0_5 = arith.constant 0 : index
    %5 = vector.load %arg4[%c0_4, %c0_5] : memref<16x1xf32, #tpu.memory_space<vmem>>, vector<16x1xf32>
    %6 = vector.broadcast %5 : vector<16x1xf32> to vector<16x256xf32>
    %7 = arith.addf %4, %6 : vector<16x256xf32>
    %cst = arith.constant 0.000000e+00 : f32
    %8 = vector.broadcast %cst : f32 to vector<16x256xf32>
    %9 = arith.maximumf %7, %8 : vector<16x256xf32>
    %c0_6 = arith.constant 0 : index
    %c0_7 = arith.constant 0 : index
    %c0_8 = arith.constant 0 : index
    %10 = vector.load %arg5[%c0_6, %c0_7, %c0_8] : memref<1x16x256xf32, #tpu.memory_space<vmem>>, vector<1x16x256xf32>
    %11 = vector.shape_cast %10 : vector<1x16x256xf32> to vector<16x256xf32>
    %12 = vector.shape_cast %9 : vector<16x256xf32> to vector<1x16x256xf32>
    tpu.vector_store %arg5[%c0_6, %c0_7, %c0_8], %12 {strides = array<i32>} : memref<1x16x256xf32, #tpu.memory_space<vmem>>, vector<1x16x256xf32>,
    return
  }
  func.func @transform_0(%arg0: i32, %arg1: i32) -> (i32, i32, i32) {
    %c0_i32 = arith.constant 0 : i32
    %c0_i32_0 = arith.constant 0 : i32
    return %arg0, %c0_i32, %arg1 : i32, i32, i32
  }
  func.func @transform_1(%arg0: i32, %arg1: i32) -> (i32, i32) {
    %c0_i32 = arith.constant 0 : i32
    %c0_i32_0 = arith.constant 0 : i32
    %c0_i32_1 = arith.constant 0 : i32
    return %c0_i32, %c0_i32_0 : i32, i32
  }
  func.func @transform_2(%arg0: i32, %arg1: i32) -> (i32, i32) {
    %c0_i32 = arith.constant 0 : i32
    %c0_i32_0 = arith.constant 0 : i32
    %c0_i32_1 = arith.constant 0 : i32
    return %c0_i32, %c0_i32_0 : i32, i32
  }
  func.func @transform_3(%arg0: i32, %arg1: i32) -> (i32, i32, i32) {
    %c0_i32 = arith.constant 0 : i32
    %c0_i32_0 = arith.constant 0 : i32
    return %arg0, %c0_i32, %arg1 : i32, i32, i32
  }
}

</mosaic_0001>

<llo_original>
// kernel: _lambda_.2
$region0: #{_lambda_.2}
  #allocation0 [shape = 'u32[]', space=smem, size = 0x4, offset = 0x4, fixed_abs, tag = 'smem constant byte address 0x4 - core index']
  #allocation1 [shape = 'u32[144,128]{1,0:T(1,128)}', space=vmem, size = 0x12000, scoped, tag = 'internal scratch']
  %s0 = inlined_call_operand.vmem [shape: f32[2,16,256], index: 0, kind: input, shape index: {}]
  %s1 = inlined_call_operand.vmem [shape: f32[2,16,256], index: 1, kind: input, shape index: {}]
  %s2 = inlined_call_operand.vmem [shape: f32[16,16], index: 2, kind: input, shape index: {}]
  %s3 = inlined_call_operand.vmem [shape: f32[16,16], index: 3, kind: input, shape index: {}]
  %s4 = inlined_call_operand.vmem [shape: f32[2,16,256], index: 4, kind: output, shape index: {0}]
  %s5 = inlined_call_operand.vmem [shape: f32[2,1,16,1], index: 5, kind: output, shape index: {1}]
  %s6 = inlined_call_operand.vmem [shape: f32[2,1,16,1], index: 6, kind: output, shape index: {2}]
  %7 = xla_tuple %s4, %s5, %s6
  %s8 = sld [smem:[#allocation0]]
  $region65: #{_lambda_.2} parent=0
    _
  %s10 = ssub.s32 1, %s8
  %s11 = scalar_select 0, %s10, %s8
  loop: start=0, step=1, limit=4
  $region2: #{_lambda_.2} parent=0 // loop_pre_header
    _
  $region3: #{_lambda_.2} parent=0 // loop_header
    %s13 = sphi 0, %s17
    %p14 = scmp.ge.s32.totalorder %s13, 4
    %s20 = sphi 0, %s32
    %s21 = sphi 0, %s28
    %s22 = sphi 0, %s20
    %s23 = sphi 0, %s21
    %s24 = sphi 0, %s22
    %s25 = sphi 0, %s23
    %s37 = sphi 0, %s39
    %s40 = sphi 0, %s37
    %s41 = sphi 0, %s40
    %s57 = sphi 0, %s41
    %s65 = sphi 0, %s67
    %s68 = sphi 0, %s65
    %s69 = sphi 0, %s68
    %s85 = sphi 0, %s69
    %s89 = sphi 0, %s89
    %s91 = sphi 0, %s89
    %s92 = sphi 0, %s91
    %s106 = sphi 0, %s92
    %s110 = sphi 0, %s110
    %s112 = sphi 0, %s110
    %s113 = sphi 0, %s112
    %s127 = sphi 0, %s113
    %s135 = sphi 0, %s137
    %s138 = sphi 0, %s135
    %s139 = sphi 0, %s138
    %s155 = sphi 0, %s139
    %s163 = sphi 0, %s165
    %s166 = sphi 0, %s163
    %s167 = sphi 0, %s166
    %s183 = sphi 0, %s167
    %s191 = sphi 0, %s193
    %s194 = sphi 0, %s191
    %s195 = sphi 0, %s194
    %s211 = sphi 0, %s195
  $region4: #{_lambda_.2} parent=0 // loop_header_branch
    %16 = sbr.rel (%p14) target = $region8
  $region5: #{_lambda_.2} parent=0 // loop_body
    %s18 = ssub.s32 %s13, 1
    %s19 = ssub.s32 %s13, 2
    %s26 = sadd.s32 1, %s21
    %p27 = scmp.ge.s32.totalorder %s26, 1
    %s28 = scalar_select %p27, 0, %s26
    %s29 = sadd.s32 1, %s20
    %s30 = scalar_select %p27, %s29, %s20
    %p31 = scmp.ge.s32.totalorder %s30, 2
    %s32 = scalar_select %p31, 0, %s30
    %s33 = ssub.s32 %s20, %s32
    %s34 = ssub.s32 %s21, %s28
    %s35 = sor.u32 %s33, %s34
    %p36 = scmp.eq.s32.totalorder %s35, 0
    %s38 = sadd.s32 %s37, 1
    %s39 = scalar_select %p36, %s37, %s38
    %p42 = pneg %p36
    %p43 = scmp.eq.s32.totalorder %s13, 1
    %p44 = por %p42, %p43
    %p45 = scmp.ne.s32.totalorder %s37, %s40
    %p46 = scmp.eq.s32.totalorder %s13, 0
    %p47 = por %p45, %p46
    %p48 = scmp.ne.s32.totalorder %s37, %s40
    %p49 = scmp.eq.s32.totalorder %s18, 1
    %p50 = por %p48, %p49
    %p51 = scmp.ne.s32.totalorder %s40, %s41
    %p52 = scmp.eq.s32.totalorder %s18, 0
    %p53 = por %p51, %p52
    %p54 = scmp.ne.s32.totalorder %s40, %s41
    %p55 = scmp.eq.s32.totalorder %s19, 1
    %p56 = por %p54, %p55
    %p58 = scmp.ne.s32.totalorder %s41, %s57
    %p59 = scmp.eq.s32.totalorder %s19, 0
    %p60 = por %p58, %p59
    %s61 = ssub.s32 %s20, %s32
    %s62 = ssub.s32 %s21, %s28
    %s63 = sor.u32 %s61, %s62
    %p64 = scmp.eq.s32.totalorder %s63, 0
    %s66 = sadd.s32 %s65, 1
    %s67 = scalar_select %p64, %s65, %s66
    %p70 = pneg %p64
    %p71 = scmp.eq.s32.totalorder %s13, 1
    %p72 = por %p70, %p71
    %p73 = scmp.ne.s32.totalorder %s65, %s68
    %p74 = scmp.eq.s32.totalorder %s13, 0
    %p75 = por %p73, %p74
    %p76 = scmp.ne.s32.totalorder %s65, %s68
    %p77 = scmp.eq.s32.totalorder %s18, 1
    %p78 = por %p76, %p77
    %p79 = scmp.ne.s32.totalorder %s68, %s69
    %p80 = scmp.eq.s32.totalorder %s18, 0
    %p81 = por %p79, %p80
    %p82 = scmp.ne.s32.totalorder %s68, %s69
    %p83 = scmp.eq.s32.totalorder %s19, 1
    %p84 = por %p82, %p83
    %p86 = scmp.ne.s32.totalorder %s69, %s85
    %p87 = scmp.eq.s32.totalorder %s19, 0
    %p88 = por %p86, %p87
    %s90 = sadd.s32 %s89, 1
    %p93 = scmp.eq.s32.totalorder %s13, 1
    %p94 = scmp.ne.s32.totalorder %s89, %s91
    %p95 = scmp.eq.s32.totalorder %s13, 0
    %p96 = por %p94, %p95
    %p97 = scmp.ne.s32.totalorder %s89, %s91
    %p98 = scmp.eq.s32.totalorder %s18, 1
    %p99 = por %p97, %p98
    %p100 = scmp.ne.s32.totalorder %s91, %s92
    %p101 = scmp.eq.s32.totalorder %s18, 0
    %p102 = por %p100, %p101
    %p103 = scmp.ne.s32.totalorder %s91, %s92
    %p104 = scmp.eq.s32.totalorder %s19, 1
    %p105 = por %p103, %p104
    %p107 = scmp.ne.s32.totalorder %s92, %s106
    %p108 = scmp.eq.s32.totalorder %s19, 0
    %p109 = por %p107, %p108
    %s111 = sadd.s32 %s110, 1
    %p114 = scmp.eq.s32.totalorder %s13, 1
    %p115 = scmp.ne.s32.totalorder %s110, %s112
    %p116 = scmp.eq.s32.totalorder %s13, 0
    %p117 = por %p115, %p116
    %p118 = scmp.ne.s32.totalorder %s110, %s112
    %p119 = scmp.eq.s32.totalorder %s18, 1
    %p120 = por %p118, %p119
    %p121 = scmp.ne.s32.totalorder %s112, %s113
    %p122 = scmp.eq.s32.totalorder %s18, 0
    %p123 = por %p121, %p122
    %p124 = scmp.ne.s32.totalorder %s112, %s113
    %p125 = scmp.eq.s32.totalorder %s19, 1
    %p126 = por %p124, %p125
    %p128 = scmp.ne.s32.totalorder %s113, %s127
    %p129 = scmp.eq.s32.totalorder %s19, 0
    %p130 = por %p128, %p129
    %s131 = ssub.s32 %s20, %s32
    %s132 = ssub.s32 %s21, %s28
    %s133 = sor.u32 %s131, %s132
    %p134 = scmp.eq.s32.totalorder %s133, 0
    %s136 = sadd.s32 %s135, 1
    %s137 = scalar_select %p134, %s135, %s136
    %p140 = pneg %p134
    %p141 = scmp.eq.s32.totalorder %s13, 1
    %p142 = por %p140, %p141
    %p143 = scmp.ne.s32.totalorder %s135, %s138
    %p144 = scmp.eq.s32.totalorder %s13, 0
    %p145 = por %p143, %p144
    %p146 = scmp.ne.s32.totalorder %s135, %s138
    %p147 = scmp.eq.s32.totalorder %s18, 1
    %p148 = por %p146, %p147
    %p149 = scmp.ne.s32.totalorder %s138, %s139
    %p150 = scmp.eq.s32.totalorder %s18, 0
    %p151 = por %p149, %p150
    %p152 = scmp.ne.s32.totalorder %s138, %s139
    %p153 = scmp.eq.s32.totalorder %s19, 1
    %p154 = por %p152, %p153
    %p156 = scmp.ne.s32.totalorder %s139, %s155
    %p157 = scmp.eq.s32.totalorder %s19, 0
    %p158 = por %p156, %p157
    %s159 = ssub.s32 %s20, %s32
    %s160 = ssub.s32 %s21, %s28
    %s161 = sor.u32 %s159, %s160
    %p162 = scmp.eq.s32.totalorder %s161, 0
    %s164 = sadd.s32 %s163, 1
    %s165 = scalar_select %p162, %s163, %s164
    %p168 = pneg %p162
    %p169 = scmp.eq.s32.totalorder %s13, 1
    %p170 = por %p168, %p169
    %p171 = scmp.ne.s32.totalorder %s163, %s166
    %p172 = scmp.eq.s32.totalorder %s13, 0
    %p173 = por %p171, %p172
    %p174 = scmp.ne.s32.totalorder %s163, %s166
    %p175 = scmp.eq.s32.totalorder %s18, 1
    %p176 = por %p174, %p175
    %p177 = scmp.ne.s32.totalorder %s166, %s167
    %p178 = scmp.eq.s32.totalorder %s18, 0
    %p179 = por %p177, %p178
    %p180 = scmp.ne.s32.totalorder %s166, %s167
    %p181 = scmp.eq.s32.totalorder %s19, 1
    %p182 = por %p180, %p181
    %p184 = scmp.ne.s32.totalorder %s167, %s183
    %p185 = scmp.eq.s32.totalorder %s19, 0
    %p186 = por %p184, %p185
    %s187 = ssub.s32 %s20, %s32
    %s188 = ssub.s32 %s21, %s28
    %s189 = sor.u32 %s187, %s188
    %p190 = scmp.eq.s32.totalorder %s189, 0
    %s192 = sadd.s32 %s191, 1
    %s193 = scalar_select %p190, %s191, %s192
    %p196 = pneg %p190
    %p197 = scmp.eq.s32.totalorder %s13, 1
    %p198 = por %p196, %p197
    %p199 = scmp.ne.s32.totalorder %s191, %s194
    %p200 = scmp.eq.s32.totalorder %s13, 0
    %p201 = por %p199, %p200
    %p202 = scmp.ne.s32.totalorder %s191, %s194
    %p203 = scmp.eq.s32.totalorder %s18, 1
    %p204 = por %p202, %p203
    %p205 = scmp.ne.s32.totalorder %s194, %s195
    %p206 = scmp.eq.s32.totalorder %s18, 0
    %p207 = por %p205, %p206
    %p208 = scmp.ne.s32.totalorder %s194, %s195
    %p209 = scmp.eq.s32.totalorder %s19, 1
    %p210 = por %p208, %p209
    %p212 = scmp.ne.s32.totalorder %s195, %s211
    %p213 = scmp.eq.s32.totalorder %s19, 0
    %p214 = por %p212, %p213
    %p215 = scmp.le.s32.totalorder 1, %s13
    %p216 = scmp.lt.s32.totalorder %s13, 3
    %p217 = pnand %p215, %p216
    %p218 = pneg %p217
    // Predicated region
    $region9: #{_lambda_.2} parent=5 // pred_check
      _
    $region10: #{_lambda_.2} parent=5 // pred_check_branch
      %220 = sbr.rel (%p217) target = $region12
    $region11: #{_lambda_.2} parent=5 // pred_region
      %s221 = ssub.s32 %s13, 1
      // Predicated region
      $region13: #{_lambda_.2} parent=11 // pred_check
        %p222 = pneg %p102
      $region14: #{_lambda_.2} parent=11 // pred_check_branch
        %224 = sbr.rel (%p222) target = $region16
      $region15: #{_lambda_.2} parent=11 // pred_region
        _
      $region16: #{_lambda_.2} parent=11 // pred_fallthru
        _
      // Predicated region
      $region17: #{_lambda_.2} parent=11 // pred_check
        %p225 = pneg %p123
      $region18: #{_lambda_.2} parent=11 // pred_check_branch
        %227 = sbr.rel (%p225) target = $region20
      $region19: #{_lambda_.2} parent=11 // pred_region
        _
      $region20: #{_lambda_.2} parent=11 // pred_fallthru
        _
    $region12: #{_lambda_.2} parent=5 // pred_fallthru
      _
    %p228 = scmp.lt.s32.totalorder %s13, 2
    // Predicated region
    $region21: #{_lambda_.2} parent=5 // pred_check
      %p229 = pneg %p228
    $region22: #{_lambda_.2} parent=5 // pred_check_branch
      %231 = sbr.rel (%p229) target = $region24
    $region23: #{_lambda_.2} parent=5 // pred_region
      // Predicated region
      $region25: #{_lambda_.2} parent=23 // pred_check
        %p232 = pneg %p47
      $region26: #{_lambda_.2} parent=23 // pred_check_branch
        %234 = sbr.rel (%p232) target = $region28
      $region27: #{_lambda_.2} parent=23 // pred_region
        %s235 = smul.u32 2, %s21
        %p236 = scmp.lt.s32.totalorder %s20, 1
        %s237 = scalar_select %p236, %s20, 1
        %p238 = scmp.lt.s32.totalorder %s235, 1
        %s239 = scalar_select %p238, %s235, 1
        %s240 = smul.addr %s237, 4
        %s241 = sadd.s32 %s239, %s240
        %s242 = smul.addr %s241, 8
        %s243 = scalar_lea.vmem %s0, %s242
        %s244 = smul.u32 2, %s21
      $region28: #{_lambda_.2} parent=23 // pred_fallthru
        _
      // Predicated region
      $region29: #{_lambda_.2} parent=23 // pred_check
        %p245 = pneg %p75
      $region30: #{_lambda_.2} parent=23 // pred_check_branch
        %247 = sbr.rel (%p245) target = $region32
      $region31: #{_lambda_.2} parent=23 // pred_region
        %s248 = smul.u32 2, %s21
        %p249 = scmp.lt.s32.totalorder %s20, 1
        %s250 = scalar_select %p249, %s20, 1
        %p251 = scmp.lt.s32.totalorder %s248, 1
        %s252 = scalar_select %p251, %s248, 1
        %s253 = smul.addr %s250, 4
        %s254 = sadd.s32 %s252, %s253
        %s255 = smul.addr %s254, 8
        %s256 = scalar_lea.vmem %s1, %s255
        %s257 = smul.u32 2, %s21
      $region32: #{_lambda_.2} parent=23 // pred_fallthru
        _
    $region24: #{_lambda_.2} parent=5 // pred_fallthru
      _
    %p258 = scmp.le.s32.totalorder 1, %s13
    %p259 = scmp.lt.s32.totalorder %s13, 3
    %p260 = pnand %p258, %p259
    %p261 = pneg %p260
    // Predicated region
    $region33: #{_lambda_.2} parent=5 // pred_check
      _
    $region34: #{_lambda_.2} parent=5 // pred_check_branch
      %263 = sbr.rel (%p260) target = $region36
    $region35: #{_lambda_.2} parent=5 // pred_region
      %s264 = ssub.s32 %s13, 1
      %s265 = smul.u32 2, %s23
      %p266 = scmp.lt.s32.totalorder %s22, 1
      %s267 = scalar_select %p266, %s22, 1
      %p268 = scmp.lt.s32.totalorder %s265, 1
      %s269 = scalar_select %p268, %s265, 1
      %s270 = smul.addr %s267, 4
      %s271 = sadd.s32 %s269, %s270
      %s272 = smul.addr %s271, 8
      %s273 = scalar_lea.vmem %s0, %s272
      %p274 = pneg %p53
      %p275 = pneg %p50
      %s276 = smul.u32 2, %s23
      %p277 = scmp.lt.s32.totalorder %s22, 1
      %s278 = scalar_select %p277, %s22, 1
      %p279 = scmp.lt.s32.totalorder %s276, 1
      %s280 = scalar_select %p279, %s276, 1
      %s281 = smul.addr %s278, 4
      %s282 = sadd.s32 %s280, %s281
      %s283 = smul.addr %s282, 8
      %s284 = scalar_lea.vmem %s1, %s283
      %p285 = pneg %p81
      %p286 = pneg %p78
      %p287 = pneg %p102
      %p288 = pneg %p99
      %p289 = pneg %p123
      %p290 = pneg %p120
      %p291 = pneg %p151
      %p292 = pneg %p148
      %s293 = smul.u32 2, %s23
      %p294 = scmp.lt.s32.totalorder %s22, 1
      %s295 = scalar_select %p294, %s22, 1
      %p296 = scmp.lt.s32.totalorder %s293, 1
      %s297 = scalar_select %p296, %s293, 1
      %s298 = smul.addr %s295, 4
      %s299 = sadd.s32 %s297, %s298
      %s300 = smul.addr %s299, 8
      %s301 = scalar_lea.vmem %s4, %s300
      %p302 = pneg %p179
      %p303 = pneg %p176
      %p304 = scmp.lt.s32.totalorder %s22, 1
      %s305 = scalar_select %p304, %s22, 1
      %p306 = scmp.lt.s32.totalorder %s23, 0
      %s307 = scalar_select %p306, %s23, 0
      %s308 = smul.addr %s307, 2
      %s309 = smul.addr %s305, 2
      %s310 = sadd.s32 %s308, %s309
      %s311 = smul.addr %s310, 8
      %s312 = scalar_lea.vmem %s5, %s311
      %p313 = pneg %p207
      %p314 = pneg %p204
      %p315 = scmp.lt.s32.totalorder %s22, 1
      %s316 = scalar_select %p315, %s22, 1
      %p317 = scmp.lt.s32.totalorder %s23, 0
      %s318 = scalar_select %p317, %s23, 0
      %s319 = smul.addr %s318, 2
      %s320 = smul.addr %s316, 2
      %s321 = sadd.s32 %s319, %s320
      %s322 = smul.addr %s321, 8
      %s323 = scalar_lea.vmem %s6, %s322
      %s324 = smul.u32 2, %s23
      %p325 = scmp.lt.s32.totalorder %s22, 1
      %s326 = scalar_select %p325, %s22, 1
      %p327 = scmp.lt.s32.totalorder %s324, 1
      %s328 = scalar_select %p327, %s324, 1
      %s329 = smul.addr %s326, 4
      %s330 = sadd.s32 %s328, %s329
      %s331 = smul.addr %s330, 8
      %s332 = scalar_lea.vmem %s0, %s331
      %s333 = smul.u32 2, %s23
      %s334 = smul.u32 2, %s23
      %p335 = scmp.lt.s32.totalorder %s22, 1
      %s336 = scalar_select %p335, %s22, 1
      %p337 = scmp.lt.s32.totalorder %s334, 1
      %s338 = scalar_select %p337, %s334, 1
      %s339 = smul.addr %s336, 4
      %s340 = sadd.s32 %s338, %s339
      %s341 = smul.addr %s340, 8
      %s342 = scalar_lea.vmem %s1, %s341
      %s343 = smul.u32 2, %s23
      %s344 = smul.u32 2, %s23
      %p345 = scmp.lt.s32.totalorder %s22, 1
      %s346 = scalar_select %p345, %s22, 1
      %p347 = scmp.lt.s32.totalorder %s344, 1
      %s348 = scalar_select %p347, %s344, 1
      %s349 = smul.addr %s346, 4
      %s350 = sadd.s32 %s348, %s349
      %s351 = smul.addr %s350, 8
      %s352 = scalar_lea.vmem %s4, %s351
      %s353 = smul.u32 2, %s23
      %p354 = scmp.lt.s32.totalorder %s22, 1
      %s355 = scalar_select %p354, %s22, 1
      %p356 = scmp.lt.s32.totalorder %s23, 0
      %s357 = scalar_select %p356, %s23, 0
      %s358 = smul.addr %s357, 2
      %s359 = smul.addr %s355, 2
      %s360 = sadd.s32 %s358, %s359
      %s361 = smul.addr %s360, 8
      %s362 = scalar_lea.vmem %s5, %s361
      %p363 = scmp.lt.s32.totalorder %s22, 1
      %s364 = scalar_select %p363, %s22, 1
      %p365 = scmp.lt.s32.totalorder %s23, 0
      %s366 = scalar_select %p365, %s23, 0
      %s367 = smul.addr %s366, 2
      %s368 = smul.addr %s364, 2
      %s369 = sadd.s32 %s367, %s368
      %s370 = smul.addr %s369, 8
      %s371 = scalar_lea.vmem %s6, %s370
      %v372 = vld [vmem:[%s2] sm:$0xff]
      %v373 = vld [vmem:[%s2 + $0x8] sm:$0xff]
      %v374 = vld [vmem:[%s332] sm:$0xff]
      %v375 = vld [vmem:[%s332 + $0x8] sm:$0xff]
      %v376 = vld [vmem:[%s332 + $0x10] sm:$0xff]
      %v377 = vld [vmem:[%s332 + $0x18] sm:$0xff]
      %v378 = vld [vmem:[%s3] sm:$0xff]
      %v379 = vld [vmem:[%s3 + $0x8] sm:$0xff]
      %v380 = vld [vmem:[%s342] sm:$0xff]
      %v381 = vld [vmem:[%s342 + $0x8] sm:$0xff]
      %v382 = vld [vmem:[%s342 + $0x10] sm:$0xff]
      %v383 = vld [vmem:[%s342 + $0x18] sm:$0xff]
      %vm384 = vcmask 130048
      %v386 = vsel %vm384, %v378, 0
      %v389 = vsel %vm384, %v379, 0
      %391 = vmatprep.subr.mxu0 %v381
      %392 = vmatpush1.msra.mxu0 %v380
      %393 = vmatprep.subr.mxu0 %v383
      %394 = vmatpush1.msra.mxu0 %v382
      %395 = vmatprep.subr.mxu0 0.0
      %396 = vmatpush1.msra.mxu0 0.0
      %397 = vmatprep.subr.mxu0 0.0
      %398 = vmatpush1.msra.mxu0 0.0
      %399 = vmatprep.subr.mxu0 0.0
      %400 = vmatpush1.msra.mxu0 0.0
      %401 = vmatprep.subr.mxu0 0.0
      %402 = vmatpush1.msra.mxu0 0.0
      %403 = vmatprep.subr.mxu0 0.0
      %404 = vmatpush1.msra.mxu0 0.0
      %405 = vmatprep.subr.mxu0 0.0
      %406 = vmatpush1.msra.mxu0 0.0
      %407 = vmatprep.subr.mxu0 0.0
      %408 = vmatpush1.msra.mxu0 0.0
      %409 = vmatprep.subr.mxu0 0.0
      %410 = vmatpush1.msra.mxu0 0.0
      %411 = vmatprep.subr.mxu0 0.0
      %412 = vmatpush1.msra.mxu0 0.0
      %413 = vmatprep.subr.mxu0 0.0
      %414 = vmatpush1.msra.mxu0 0.0
      %415 = vmatprep.subr.mxu0 0.0
      %416 = vmatpush1.msra.mxu0 0.0
      %417 = vmatprep.subr.mxu0 0.0
      %418 = vmatpush1.msra.mxu0 0.0
      %419 = vmatprep.subr.mxu0 0.0
      %420 = vmatpush1.msra.mxu0 0.0
      %421 = vmatprep.subr.mxu0 0.0
      %422 = vmatpush1.msra.mxu0 0.0
      %423 = vmatprep.subr.mxu0 0.0
      %424 = vmatpush1.msra.mxu0 0.0
      %425 = vmatprep.subr.mxu0 0.0
      %426 = vmatpush1.msra.mxu0 0.0
      %427 = vmatprep.subr.mxu0 0.0
      %428 = vmatpush1.msra.mxu0 0.0
      %429 = vmatprep.subr.mxu0 0.0
      %430 = vmatpush1.msra.mxu0 0.0
      %431 = vmatprep.subr.mxu0 0.0
      %432 = vmatpush1.msra.mxu0 0.0
      %433 = vmatprep.subr.mxu0 0.0
      %434 = vmatpush1.msra.mxu0 0.0
      %435 = vmatprep.subr.mxu0 0.0
      %436 = vmatpush1.msra.mxu0 0.0
      %437 = vmatprep.subr.mxu0 0.0
      %438 = vmatpush1.msra.mxu0 0.0
      %439 = vmatprep.subr.mxu0 0.0
      %440 = vmatpush1.msra.mxu0 0.0
      %441 = vmatprep.subr.mxu0 0.0
      %442 = vmatpush1.msra.mxu0 0.0
      %443 = vmatprep.subr.mxu0 0.0
      %444 = vmatpush1.msra.mxu0 0.0
      %445 = vmatprep.subr.mxu0 0.0
      %446 = vmatpush1.msra.mxu0 0.0
      %447 = vmatprep.subr.mxu0 0.0
      %448 = vmatpush1.msra.mxu0 0.0
      %449 = vmatprep.subr.mxu0 0.0
      %450 = vmatpush1.msra.mxu0 0.0
      %451 = vmatprep.subr.mxu0 0.0
      %452 = vmatpush1.msra.mxu0 0.0
      %453 = vmatprep.subr.mxu0 0.0
      %454 = vmatpush1.msra.mxu0 0.0
      %455 = vmatprep.mubr.f32.mxu0 0.0
      %456 = vmatmul.mubr.f32.gmra.mrb[0].mxu0 %v386
      %v457 = vpop.f32.mrb[0].mxu0
      %v458 = vadd.f32 0.0, %v457
      %v459 = vpop.f32.mrb[0].mxu0
      %v460 = vadd.f32 0.0, %v459
      %461 = vmatprep.mubr.f32.mxu0 0.0
      %462 = vmatmul.mubr.f32.gmra.mrb[0].mxu0 %v389
      %v463 = vpop.f32.mrb[0].mxu0
      %v464 = vadd.f32 0.0, %v463
      %v465 = vpop.f32.mrb[0].mxu0
      %v466 = vadd.f32 0.0, %v465
      %467 = vdwg.mxu0
      %v469 = vsel %vm384, %v372, 0
      %v472 = vsel %vm384, %v373, 0
      %474 = vmatprep.subr.mxu0 %v375
      %475 = vmatpush1.msra.mxu0 %v374
      %476 = vmatprep.subr.mxu0 %v377
      %477 = vmatpush1.msra.mxu0 %v376
      %478 = vmatprep.subr.mxu0 0.0
      %479 = vmatpush1.msra.mxu0 0.0
      %480 = vmatprep.subr.mxu0 0.0
      %481 = vmatpush1.msra.mxu0 0.0
      %482 = vmatprep.subr.mxu0 0.0
      %483 = vmatpush1.msra.mxu0 0.0
      %484 = vmatprep.subr.mxu0 0.0
      %485 = vmatpush1.msra.mxu0 0.0
      %486 = vmatprep.subr.mxu0 0.0
      %487 = vmatpush1.msra.mxu0 0.0
      %488 = vmatprep.subr.mxu0 0.0
      %489 = vmatpush1.msra.mxu0 0.0
      %490 = vmatprep.subr.mxu0 0.0
      %491 = vmatpush1.msra.mxu0 0.0
      %492 = vmatprep.subr.mxu0 0.0
      %493 = vmatpush1.msra.mxu0 0.0
      %494 = vmatprep.subr.mxu0 0.0
      %495 = vmatpush1.msra.mxu0 0.0
      %496 = vmatprep.subr.mxu0 0.0
      %497 = vmatpush1.msra.mxu0 0.0
      %498 = vmatprep.subr.mxu0 0.0
      %499 = vmatpush1.msra.mxu0 0.0
      %500 = vmatprep.subr.mxu0 0.0
      %501 = vmatpush1.msra.mxu0 0.0
      %502 = vmatprep.subr.mxu0 0.0
      %503 = vmatpush1.msra.mxu0 0.0
      %504 = vmatprep.subr.mxu0 0.0
      %505 = vmatpush1.msra.mxu0 0.0
      %506 = vmatprep.subr.mxu0 0.0
      %507 = vmatpush1.msra.mxu0 0.0
      %508 = vmatprep.subr.mxu0 0.0
      %509 = vmatpush1.msra.mxu0 0.0
      %510 = vmatprep.subr.mxu0 0.0
      %511 = vmatpush1.msra.mxu0 0.0
      %512 = vmatprep.subr.mxu0 0.0
      %513 = vmatpush1.msra.mxu0 0.0
      %514 = vmatprep.subr.mxu0 0.0
      %515 = vmatpush1.msra.mxu0 0.0
      %516 = vmatprep.subr.mxu0 0.0
      %517 = vmatpush1.msra.mxu0 0.0
      %518 = vmatprep.subr.mxu0 0.0
      %519 = vmatpush1.msra.mxu0 0.0
      %520 = vmatprep.subr.mxu0 0.0
      %521 = vmatpush1.msra.mxu0 0.0
      %522 = vmatprep.subr.mxu0 0.0
      %523 = vmatpush1.msra.mxu0 0.0
      %524 = vmatprep.subr.mxu0 0.0
      %525 = vmatpush1.msra.mxu0 0.0
      %526 = vmatprep.subr.mxu0 0.0
      %527 = vmatpush1.msra.mxu0 0.0
      %528 = vmatprep.subr.mxu0 0.0
      %529 = vmatpush1.msra.mxu0 0.0
      %530 = vmatprep.subr.mxu0 0.0
      %531 = vmatpush1.msra.mxu0 0.0
      %532 = vmatprep.subr.mxu0 0.0
      %533 = vmatpush1.msra.mxu0 0.0
      %534 = vmatprep.subr.mxu0 0.0
      %535 = vmatpush1.msra.mxu0 0.0
      %536 = vmatprep.subr.mxu0 0.0
      %537 = vmatpush1.msra.mxu0 0.0
      %538 = vmatprep.mubr.f32.mxu0 0.0
      %539 = vmatmul.mubr.f32.gmra.mrb[0].mxu0 %v469
      %v540 = vpop.f32.mrb[0].mxu0
      %v541 = vadd.f32 %v458, %v540
      %v542 = vpop.f32.mrb[0].mxu0
      %v543 = vadd.f32 %v460, %v542
      %544 = vmatprep.mubr.f32.mxu0 0.0
      %545 = vmatmul.mubr.f32.gmra.mrb[0].mxu0 %v472
      %v546 = vpop.f32.mrb[0].mxu0
      %v547 = vadd.f32 %v464, %v546
      %v548 = vpop.f32.mrb[0].mxu0
      %v549 = vadd.f32 %v466, %v548
      %550 = vdwg.mxu0
      %551 = vst [vmem:[%s352] sm:$0xff] %v541
      %552 = vst [vmem:[%s352 + $0x8] sm:$0xff] %v543
      %553 = vst [vmem:[%s352 + $0x10] sm:$0xff] %v547
      %554 = vst [vmem:[%s352 + $0x18] sm:$0xff] %v549
      %v555 = vadd.f32 %v541, %v543
      %556 = vadd.xlane.f32.xlu0 %v555
      %v557 = vpop.xlane.xlu0 %556
      %v558 = vadd.f32 %v547, %v549
      %559 = vadd.xlane.f32.xlu0 %v558
      %v560 = vpop.xlane.xlu0 %559
      %vm561 = vcmask 7168
      %562 = vst.msk [vmem:[%s362] sm:$0xff] %vm561, %v557
      %563 = vst.msk [vmem:[%s362 + $0x8] sm:$0xff] %vm561, %v560
      %v564 = vmul.f32 %v541, %v541
      %v565 = vmul.f32 %v543, %v543
      %v566 = vmul.f32 %v547, %v547
      %v567 = vmul.f32 %v549, %v549
      %v568 = vadd.f32 %v564, %v565
      %569 = vadd.xlane.f32.xlu0 %v568
      %v570 = vpop.xlane.xlu0 %569
      %v571 = vadd.f32 %v566, %v567
      %572 = vadd.xlane.f32.xlu0 %v571
      %v573 = vpop.xlane.xlu0 %572
      %574 = vst.msk [vmem:[%s371] sm:$0xff] %vm561, %v570
      %575 = vst.msk [vmem:[%s371 + $0x8] sm:$0xff] %vm561, %v573
      %s576 = smul.u32 2, %s23
      %p577 = scmp.lt.s32.totalorder %s22, 1
      %s578 = scalar_select %p577, %s22, 1
      %p579 = scmp.lt.s32.totalorder %s576, 1
      %s580 = scalar_select %p579, %s576, 1
      %s581 = smul.addr %s578, 4
      %s582 = sadd.s32 %s580, %s581
      %s583 = smul.addr %s582, 8
      %s584 = scalar_lea.vmem %s4, %s583
      %p585 = scmp.lt.s32.totalorder %s22, 1
      %s586 = scalar_select %p585, %s22, 1
      %p587 = scmp.lt.s32.totalorder %s23, 0
      %s588 = scalar_select %p587, %s23, 0
      %s589 = smul.addr %s588, 2
      %s590 = smul.addr %s586, 2
      %s591 = sadd.s32 %s589, %s590
      %s592 = smul.addr %s591, 8
      %s593 = scalar_lea.vmem %s5, %s592
      %p594 = scmp.lt.s32.totalorder %s22, 1
      %s595 = scalar_select %p594, %s22, 1
      %p596 = scmp.lt.s32.totalorder %s23, 0
      %s597 = scalar_select %p596, %s23, 0
      %s598 = smul.addr %s597, 2
      %s599 = smul.addr %s595, 2
      %s600 = sadd.s32 %s598, %s599
      %s601 = smul.addr %s600, 8
      %s602 = scalar_lea.vmem %s6, %s601
      // Predicated region
      $region37: #{_lambda_.2} parent=35 // pred_check
        %p603 = pneg %p148
      $region38: #{_lambda_.2} parent=35 // pred_check_branch
        %605 = sbr.rel (%p603) target = $region40
      $region39: #{_lambda_.2} parent=35 // pred_region
        %s606 = smul.u32 2, %s23
      $region40: #{_lambda_.2} parent=35 // pred_fallthru
        _
      // Predicated region
      $region41: #{_lambda_.2} parent=35 // pred_check
        %p607 = pneg %p176
      $region42: #{_lambda_.2} parent=35 // pred_check_branch
        %609 = sbr.rel (%p607) target = $region44
      $region43: #{_lambda_.2} parent=35 // pred_region
        _
      $region44: #{_lambda_.2} parent=35 // pred_fallthru
        _
      // Predicated region
      $region45: #{_lambda_.2} parent=35 // pred_check
        %p610 = pneg %p204
      $region46: #{_lambda_.2} parent=35 // pred_check_branch
        %612 = sbr.rel (%p610) target = $region48
      $region47: #{_lambda_.2} parent=35 // pred_region
        _
      $region48: #{_lambda_.2} parent=35 // pred_fallthru
        _
    $region36: #{_lambda_.2} parent=5 // pred_fallthru
      _
    %p613 = scmp.le.s32.totalorder 2, %s13
    // Predicated region
    $region49: #{_lambda_.2} parent=5 // pred_check
      %p614 = pneg %p613
    $region50: #{_lambda_.2} parent=5 // pred_check_branch
      %616 = sbr.rel (%p614) target = $region52
    $region51: #{_lambda_.2} parent=5 // pred_region
      %s617 = ssub.s32 %s13, 2
      // Predicated region
      $region53: #{_lambda_.2} parent=51 // pred_check
        %p618 = pneg %p154
      $region54: #{_lambda_.2} parent=51 // pred_check_branch
        %620 = sbr.rel (%p618) target = $region56
      $region55: #{_lambda_.2} parent=51 // pred_region
        %s621 = smul.u32 2, %s25
        %p622 = scmp.lt.s32.totalorder %s24, 1
        %s623 = scalar_select %p622, %s24, 1
        %p624 = scmp.lt.s32.totalorder %s621, 1
        %s625 = scalar_select %p624, %s621, 1
        %s626 = smul.addr %s623, 4
        %s627 = sadd.s32 %s625, %s626
        %s628 = smul.addr %s627, 8
        %s629 = scalar_lea.vmem %s4, %s628
      $region56: #{_lambda_.2} parent=51 // pred_fallthru
        _
      // Predicated region
      $region57: #{_lambda_.2} parent=51 // pred_check
        %p630 = pneg %p182
      $region58: #{_lambda_.2} parent=51 // pred_check_branch
        %632 = sbr.rel (%p630) target = $region60
      $region59: #{_lambda_.2} parent=51 // pred_region
        %p633 = scmp.lt.s32.totalorder %s24, 1
        %s634 = scalar_select %p633, %s24, 1
        %p635 = scmp.lt.s32.totalorder %s25, 0
        %s636 = scalar_select %p635, %s25, 0
        %s637 = smul.addr %s636, 2
        %s638 = smul.addr %s634, 2
        %s639 = sadd.s32 %s637, %s638
        %s640 = smul.addr %s639, 8
        %s641 = scalar_lea.vmem %s5, %s640
      $region60: #{_lambda_.2} parent=51 // pred_fallthru
        _
      // Predicated region
      $region61: #{_lambda_.2} parent=51 // pred_check
        %p642 = pneg %p210
      $region62: #{_lambda_.2} parent=51 // pred_check_branch
        %644 = sbr.rel (%p642) target = $region64
      $region63: #{_lambda_.2} parent=51 // pred_region
        %p645 = scmp.lt.s32.totalorder %s24, 1
        %s646 = scalar_select %p645, %s24, 1
        %p647 = scmp.lt.s32.totalorder %s25, 0
        %s648 = scalar_select %p647, %s25, 0
        %s649 = smul.addr %s648, 2
        %s650 = smul.addr %s646, 2
        %s651 = sadd.s32 %s649, %s650
        %s652 = smul.addr %s651, 8
        %s653 = scalar_lea.vmem %s6, %s652
      $region64: #{_lambda_.2} parent=51 // pred_fallthru
        _
    $region52: #{_lambda_.2} parent=5 // pred_fallthru
      _
  $region6: #{_lambda_.2} parent=0 // loop_footer
    %s17 = sadd.s32 1, %s13
  $region7: #{_lambda_.2} parent=0 // loop_footer_branch
    %12 = sbr.rel target = $region3
  $region8: #{_lambda_.2} parent=0 // loop_exit
    _

// kernel: _lambda_.3
$region0: #{_lambda_.3}
  #allocation0 [shape = 'u32[]', space=smem, size = 0x4, offset = 0x4, fixed_abs, tag = 'smem constant byte address 0x4 - core index']
  #allocation1 [shape = 'u32[144,128]{1,0:T(1,128)}', space=vmem, size = 0x12000, scoped, tag = 'internal scratch']
  %s0 = inlined_call_operand.vmem [shape: f32[2,16,256], index: 0, kind: input, shape index: {}, may-alias: {0,3}]
  %s1 = inlined_call_operand.vmem [shape: f32[16,1], index: 1, kind: input, shape index: {}]
  %s2 = inlined_call_operand.vmem [shape: f32[16,1], index: 2, kind: input, shape index: {}]
  %s3 = inlined_call_operand.vmem [shape: f32[2,16,256], index: 3, kind: output, shape index: {}, may-alias: {0,3}]
  %s4 = sld [smem:[#allocation0]]
  $region45: #{_lambda_.3} parent=0
    _
  %s6 = ssub.s32 1, %s4
  %s7 = scalar_select 0, %s6, %s4
  loop: start=0, step=1, limit=4
  $region2: #{_lambda_.3} parent=0 // loop_pre_header
    _
  $region3: #{_lambda_.3} parent=0 // loop_header
    %s9 = sphi 0, %s13
    %p10 = scmp.ge.s32.totalorder %s9, 4
    %s16 = sphi 0, %s28
    %s17 = sphi 0, %s24
    %s18 = sphi 0, %s16
    %s19 = sphi 0, %s17
    %s20 = sphi 0, %s18
    %s21 = sphi 0, %s19
    %s33 = sphi 0, %s35
    %s36 = sphi 0, %s33
    %s37 = sphi 0, %s36
    %s53 = sphi 0, %s37
    %s57 = sphi 0, %s57
    %s59 = sphi 0, %s57
    %s60 = sphi 0, %s59
    %s74 = sphi 0, %s60
    %s78 = sphi 0, %s78
    %s80 = sphi 0, %s78
    %s81 = sphi 0, %s80
    %s95 = sphi 0, %s81
    %s103 = sphi 0, %s105
    %s106 = sphi 0, %s103
    %s107 = sphi 0, %s106
    %s123 = sphi 0, %s107
  $region4: #{_lambda_.3} parent=0 // loop_header_branch
    %12 = sbr.rel (%p10) target = $region8
  $region5: #{_lambda_.3} parent=0 // loop_body
    %s14 = ssub.s32 %s9, 1
    %s15 = ssub.s32 %s9, 2
    %s22 = sadd.s32 1, %s17
    %p23 = scmp.ge.s32.totalorder %s22, 1
    %s24 = scalar_select %p23, 0, %s22
    %s25 = sadd.s32 1, %s16
    %s26 = scalar_select %p23, %s25, %s16
    %p27 = scmp.ge.s32.totalorder %s26, 2
    %s28 = scalar_select %p27, 0, %s26
    %s29 = ssub.s32 %s16, %s28
    %s30 = ssub.s32 %s17, %s24
    %s31 = sor.u32 %s29, %s30
    %p32 = scmp.eq.s32.totalorder %s31, 0
    %s34 = sadd.s32 %s33, 1
    %s35 = scalar_select %p32, %s33, %s34
    %p38 = pneg %p32
    %p39 = scmp.eq.s32.totalorder %s9, 1
    %p40 = por %p38, %p39
    %p41 = scmp.ne.s32.totalorder %s33, %s36
    %p42 = scmp.eq.s32.totalorder %s9, 0
    %p43 = por %p41, %p42
    %p44 = scmp.ne.s32.totalorder %s33, %s36
    %p45 = scmp.eq.s32.totalorder %s14, 1
    %p46 = por %p44, %p45
    %p47 = scmp.ne.s32.totalorder %s36, %s37
    %p48 = scmp.eq.s32.totalorder %s14, 0
    %p49 = por %p47, %p48
    %p50 = scmp.ne.s32.totalorder %s36, %s37
    %p51 = scmp.eq.s32.totalorder %s15, 1
    %p52 = por %p50, %p51
    %p54 = scmp.ne.s32.totalorder %s37, %s53
    %p55 = scmp.eq.s32.totalorder %s15, 0
    %p56 = por %p54, %p55
    %s58 = sadd.s32 %s57, 1
    %p61 = scmp.eq.s32.totalorder %s9, 1
    %p62 = scmp.ne.s32.totalorder %s57, %s59
    %p63 = scmp.eq.s32.totalorder %s9, 0
    %p64 = por %p62, %p63
    %p65 = scmp.ne.s32.totalorder %s57, %s59
    %p66 = scmp.eq.s32.totalorder %s14, 1
    %p67 = por %p65, %p66
    %p68 = scmp.ne.s32.totalorder %s59, %s60
    %p69 = scmp.eq.s32.totalorder %s14, 0
    %p70 = por %p68, %p69
    %p71 = scmp.ne.s32.totalorder %s59, %s60
    %p72 = scmp.eq.s32.totalorder %s15, 1
    %p73 = por %p71, %p72
    %p75 = scmp.ne.s32.totalorder %s60, %s74
    %p76 = scmp.eq.s32.totalorder %s15, 0
    %p77 = por %p75, %p76
    %s79 = sadd.s32 %s78, 1
    %p82 = scmp.eq.s32.totalorder %s9, 1
    %p83 = scmp.ne.s32.totalorder %s78, %s80
    %p84 = scmp.eq.s32.totalorder %s9, 0
    %p85 = por %p83, %p84
    %p86 = scmp.ne.s32.totalorder %s78, %s80
    %p87 = scmp.eq.s32.totalorder %s14, 1
    %p88 = por %p86, %p87
    %p89 = scmp.ne.s32.totalorder %s80, %s81
    %p90 = scmp.eq.s32.totalorder %s14, 0
    %p91 = por %p89, %p90
    %p92 = scmp.ne.s32.totalorder %s80, %s81
    %p93 = scmp.eq.s32.totalorder %s15, 1
    %p94 = por %p92, %p93
    %p96 = scmp.ne.s32.totalorder %s81, %s95
    %p97 = scmp.eq.s32.totalorder %s15, 0
    %p98 = por %p96, %p97
    %s99 = ssub.s32 %s16, %s28
    %s100 = ssub.s32 %s17, %s24
    %s101 = sor.u32 %s99, %s100
    %p102 = scmp.eq.s32.totalorder %s101, 0
    %s104 = sadd.s32 %s103, 1
    %s105 = scalar_select %p102, %s103, %s104
    %p108 = pneg %p102
    %p109 = scmp.eq.s32.totalorder %s9, 1
    %p110 = por %p108, %p109
    %p111 = scmp.ne.s32.totalorder %s103, %s106
    %p112 = scmp.eq.s32.totalorder %s9, 0
    %p113 = por %p111, %p112
    %p114 = scmp.ne.s32.totalorder %s103, %s106
    %p115 = scmp.eq.s32.totalorder %s14, 1
    %p116 = por %p114, %p115
    %p117 = scmp.ne.s32.totalorder %s106, %s107
    %p118 = scmp.eq.s32.totalorder %s14, 0
    %p119 = por %p117, %p118
    %p120 = scmp.ne.s32.totalorder %s106, %s107
    %p121 = scmp.eq.s32.totalorder %s15, 1
    %p122 = por %p120, %p121
    %p124 = scmp.ne.s32.totalorder %s107, %s123
    %p125 = scmp.eq.s32.totalorder %s15, 0
    %p126 = por %p124, %p125
    %p127 = scmp.le.s32.totalorder 1, %s9
    %p128 = scmp.lt.s32.totalorder %s9, 3
    %p129 = pnand %p127, %p128
    %p130 = pneg %p129
    // Predicated region
    $region9: #{_lambda_.3} parent=5 // pred_check
      _
    $region10: #{_lambda_.3} parent=5 // pred_check_branch
      %132 = sbr.rel (%p129) target = $region12
    $region11: #{_lambda_.3} parent=5 // pred_region
      %s133 = ssub.s32 %s9, 1
      // Predicated region
      $region13: #{_lambda_.3} parent=11 // pred_check
        %p134 = pneg %p70
      $region14: #{_lambda_.3} parent=11 // pred_check_branch
        %136 = sbr.rel (%p134) target = $region16
      $region15: #{_lambda_.3} parent=11 // pred_region
        _
      $region16: #{_lambda_.3} parent=11 // pred_fallthru
        _
      // Predicated region
      $region17: #{_lambda_.3} parent=11 // pred_check
        %p137 = pneg %p91
      $region18: #{_lambda_.3} parent=11 // pred_check_branch
        %139 = sbr.rel (%p137) target = $region20
      $region19: #{_lambda_.3} parent=11 // pred_region
        _
      $region20: #{_lambda_.3} parent=11 // pred_fallthru
        _
    $region12: #{_lambda_.3} parent=5 // pred_fallthru
      _
    %p140 = scmp.lt.s32.totalorder %s9, 2
    // Predicated region
    $region21: #{_lambda_.3} parent=5 // pred_check
      %p141 = pneg %p140
    $region22: #{_lambda_.3} parent=5 // pred_check_branch
      %143 = sbr.rel (%p141) target = $region24
    $region23: #{_lambda_.3} parent=5 // pred_region
      // Predicated region
      $region25: #{_lambda_.3} parent=23 // pred_check
        %p144 = pneg %p43
      $region26: #{_lambda_.3} parent=23 // pred_check_branch
        %146 = sbr.rel (%p144) target = $region28
      $region27: #{_lambda_.3} parent=23 // pred_region
        %s147 = smul.u32 2, %s17
        %p148 = scmp.lt.s32.totalorder %s16, 1
        %s149 = scalar_select %p148, %s16, 1
        %p150 = scmp.lt.s32.totalorder %s147, 1
        %s151 = scalar_select %p150, %s147, 1
        %s152 = smul.addr %s149, 4
        %s153 = sadd.s32 %s151, %s152
        %s154 = smul.addr %s153, 8
        %s155 = scalar_lea.vmem %s0, %s154
        %s156 = smul.u32 2, %s17
      $region28: #{_lambda_.3} parent=23 // pred_fallthru
        _
    $region24: #{_lambda_.3} parent=5 // pred_fallthru
      _
    %p157 = scmp.le.s32.totalorder 1, %s9
    %p158 = scmp.lt.s32.totalorder %s9, 3
    %p159 = pnand %p157, %p158
    %p160 = pneg %p159
    // Predicated region
    $region29: #{_lambda_.3} parent=5 // pred_check
      _
    $region30: #{_lambda_.3} parent=5 // pred_check_branch
      %162 = sbr.rel (%p159) target = $region32
    $region31: #{_lambda_.3} parent=5 // pred_region
      %s163 = ssub.s32 %s9, 1
      %s164 = smul.u32 2, %s19
      %p165 = scmp.lt.s32.totalorder %s18, 1
      %s166 = scalar_select %p165, %s18, 1
      %p167 = scmp.lt.s32.totalorder %s164, 1
      %s168 = scalar_select %p167, %s164, 1
      %s169 = smul.addr %s166, 4
      %s170 = sadd.s32 %s168, %s169
      %s171 = smul.addr %s170, 8
      %s172 = scalar_lea.vmem %s0, %s171
      %p173 = pneg %p49
      %p174 = pneg %p46
      %p175 = pneg %p70
      %p176 = pneg %p67
      %p177 = pneg %p91
      %p178 = pneg %p88
      %p179 = pneg %p119
      %p180 = pneg %p116
      %s181 = smul.u32 2, %s19
      %p182 = scmp.lt.s32.totalorder %s18, 1
      %s183 = scalar_select %p182, %s18, 1
      %p184 = scmp.lt.s32.totalorder %s181, 1
      %s185 = scalar_select %p184, %s181, 1
      %s186 = smul.addr %s183, 4
      %s187 = sadd.s32 %s185, %s186
      %s188 = smul.addr %s187, 8
      %s189 = scalar_lea.vmem %s3, %s188
      %s190 = smul.u32 2, %s19
      %p191 = scmp.lt.s32.totalorder %s18, 1
      %s192 = scalar_select %p191, %s18, 1
      %p193 = scmp.lt.s32.totalorder %s190, 1
      %s194 = scalar_select %p193, %s190, 1
      %s195 = smul.addr %s192, 4
      %s196 = sadd.s32 %s194, %s195
      %s197 = smul.addr %s196, 8
      %s198 = scalar_lea.vmem %s0, %s197
      %s199 = smul.u32 2, %s19
      %s200 = smul.u32 2, %s19
      %p201 = scmp.lt.s32.totalorder %s18, 1
      %s202 = scalar_select %p201, %s18, 1
      %p203 = scmp.lt.s32.totalorder %s200, 1
      %s204 = scalar_select %p203, %s200, 1
      %s205 = smul.addr %s202, 4
      %s206 = sadd.s32 %s204, %s205
      %s207 = smul.addr %s206, 8
      %s208 = scalar_lea.vmem %s3, %s207
      %s209 = smul.u32 2, %s19
      %v210 = vld [vmem:[%s198] sm:$0xff]
      %v211 = vld [vmem:[%s198 + $0x8] sm:$0xff]
      %v212 = vld [vmem:[%s198 + $0x10] sm:$0xff]
      %v213 = vld [vmem:[%s198 + $0x18] sm:$0xff]
      %v214 = vld [vmem:[%s1] sm:$0xff]
      %v215 = vld [vmem:[%s1 + $0x8] sm:$0xff]
      %217 = vset.pattern.permute.xlu0 0
      %218 = vperm.xlu0 %217, %v214
      %v219 = vpop.permute.xlu0 %218
      %222 = vset.pattern.permute.xlu0 0
      %223 = vperm.xlu0 %222, %v215
      %v224 = vpop.permute.xlu0 %223
      %v226 = vmul.f32 %v210, %v219
      %v227 = vmul.f32 %v211, %v219
      %v228 = vmul.f32 %v212, %v224
      %v229 = vmul.f32 %v213, %v224
      %v230 = vld [vmem:[%s2] sm:$0xff]
      %v231 = vld [vmem:[%s2 + $0x8] sm:$0xff]
      %233 = vset.pattern.permute.xlu0 0
      %234 = vperm.xlu0 %233, %v230
      %v235 = vpop.permute.xlu0 %234
      %238 = vset.pattern.permute.xlu0 0
      %239 = vperm.xlu0 %238, %v231
      %v240 = vpop.permute.xlu0 %239
      %v242 = vadd.f32 %v226, %v235
      %v243 = vadd.f32 %v227, %v235
      %v244 = vadd.f32 %v228, %v240
      %v245 = vadd.f32 %v229, %v240
      %v246 = vmax.f32 %v242, 0.0
      %v247 = vmax.f32 %v243, 0.0
      %v248 = vmax.f32 %v244, 0.0
      %v249 = vmax.f32 %v245, 0.0
      %250 = vst [vmem:[%s208] sm:$0xff] %v246
      %251 = vst [vmem:[%s208 + $0x8] sm:$0xff] %v247
      %252 = vst [vmem:[%s208 + $0x10] sm:$0xff] %v248
      %253 = vst [vmem:[%s208 + $0x18] sm:$0xff] %v249
      %s254 = smul.u32 2, %s19
      %p255 = scmp.lt.s32.totalorder %s18, 1
      %s256 = scalar_select %p255, %s18, 1
      %p257 = scmp.lt.s32.totalorder %s254, 1
      %s258 = scalar_select %p257, %s254, 1
      %s259 = smul.addr %s256, 4
      %s260 = sadd.s32 %s258, %s259
      %s261 = smul.addr %s260, 8
      %s262 = scalar_lea.vmem %s3, %s261
      // Predicated region
      $region33: #{_lambda_.3} parent=31 // pred_check
        %p263 = pneg %p116
      $region34: #{_lambda_.3} parent=31 // pred_check_branch
        %265 = sbr.rel (%p263) target = $region36
      $region35: #{_lambda_.3} parent=31 // pred_region
        %s266 = smul.u32 2, %s19
      $region36: #{_lambda_.3} parent=31 // pred_fallthru
        _
    $region32: #{_lambda_.3} parent=5 // pred_fallthru
      _
    %p267 = scmp.le.s32.totalorder 2, %s9
    // Predicated region
    $region37: #{_lambda_.3} parent=5 // pred_check
      %p268 = pneg %p267
    $region38: #{_lambda_.3} parent=5 // pred_check_branch
      %270 = sbr.rel (%p268) target = $region40
    $region39: #{_lambda_.3} parent=5 // pred_region
      %s271 = ssub.s32 %s9, 2
      // Predicated region
      $region41: #{_lambda_.3} parent=39 // pred_check
        %p272 = pneg %p122
      $region42: #{_lambda_.3} parent=39 // pred_check_branch
        %274 = sbr.rel (%p272) target = $region44
      $region43: #{_lambda_.3} parent=39 // pred_region
        %s275 = smul.u32 2, %s21
        %p276 = scmp.lt.s32.totalorder %s20, 1
        %s277 = scalar_select %p276, %s20, 1
        %p278 = scmp.lt.s32.totalorder %s275, 1
        %s279 = scalar_select %p278, %s275, 1
        %s280 = smul.addr %s277, 4
        %s281 = sadd.s32 %s279, %s280
        %s282 = smul.addr %s281, 8
        %s283 = scalar_lea.vmem %s3, %s282
      $region44: #{_lambda_.3} parent=39 // pred_fallthru
        _
    $region40: #{_lambda_.3} parent=5 // pred_fallthru
      _
  $region6: #{_lambda_.3} parent=0 // loop_footer
    %s13 = sadd.s32 1, %s9
  $region7: #{_lambda_.3} parent=0 // loop_footer_branch
    %8 = sbr.rel target = $region3
  $region8: #{_lambda_.3} parent=0 // loop_exit
    _

</llo_original>
